<compile_context>
chip_gen: v6e
topology: v6e:2x2x1
jax: 0.10.0
libtpu: 0.0.40
codegen_flags: <defaults>
</compile_context>

<pallas_src>
import jax
import jax.numpy as jnp
from jax.experimental import pallas as pl
from jax.experimental.pallas import tpu as pltpu


def _round_up(x: int, m: int) -> int:
    return ((x + m - 1) // m) * m


def param_actor_kernel(x_ref, w1_ref, b1_ref, w2_ref, b2_ref, w3_ref, b3_ref,
                       out_ref):
    # x_ref: (TB, obs_dim) f32; weights/biases f32 (VMEM-resident); out f32.
    x = x_ref[...]
    # Linear(obs_dim, 128) + ReLU   (f32 operands, f32 MXU accumulation)
    h1 = jnp.dot(x, w1_ref[...], preferred_element_type=jnp.float32) + b1_ref[...]
    h1 = jnp.maximum(h1, 0.0)
    # Linear(128, 64) + ReLU
    h2 = jnp.dot(h1, w2_ref[...], preferred_element_type=jnp.float32) + b2_ref[...]
    h2 = jnp.maximum(h2, 0.0)
    # Linear(64, apd)  (no activation on the output layer)
    out = jnp.dot(h2, w3_ref[...], preferred_element_type=jnp.float32) + b3_ref[...]
    out_ref[...] = out.astype(out_ref.dtype)


def prepare_param_actor_params(params):
    """One-time prep: ensure f32 and biases shaped (1, N) for broadcasting."""
    w1, b1, w2, b2, w3, b3 = params
    f32 = jnp.float32
    return (
        w1.astype(f32), jnp.reshape(b1, (1, -1)).astype(f32),
        w2.astype(f32), jnp.reshape(b2, (1, -1)).astype(f32),
        w3.astype(f32), jnp.reshape(b3, (1, -1)).astype(f32),
    )


def param_actor_forward(state, prepared_params, *, tile_batch=2048):
    w1, b1, w2, b2, w3, b3 = prepared_params
    batch, obs_dim = state.shape
    h1_dim = w1.shape[1]
    h2_dim = w2.shape[1]
    apd = w3.shape[1]

    # Batch tile: multiple of 8 (f32 sublane), capped at tile_batch, and small
    # enough that batches that fit give >= 2 "parallel" grid steps (keeps both
    # v7x TensorCores busy; harmless on v5e/v6e).  No wrapper-side pad: the
    # ragged last block is clipped by Pallas (OOB rows are never written back,
    # and each output row depends only on its own input row).
    tb = min(int(tile_batch), _round_up(pl.cdiv(batch, 2), 8))
    tb = max(tb, 8)
    grid = (pl.cdiv(batch, tb),)

    flops = 2 * batch * (obs_dim * h1_dim + h1_dim * h2_dim + h2_dim * apd)
    bytes_accessed = int(
        batch * obs_dim * 4                              # state (f32)
        + (w1.size + w2.size + w3.size) * 4              # weights (f32)
        + (b1.size + b2.size + b3.size) * 4              # biases (f32)
        + batch * apd * 4                                # output (f32, unpadded)
    )

    out = pl.pallas_call(
        param_actor_kernel,
        out_shape=jax.ShapeDtypeStruct((batch, apd), jnp.float32),
        grid=grid,
        in_specs=[
            pl.BlockSpec((tb, obs_dim), lambda i: (i, 0)),   # state tile
            pl.BlockSpec(w1.shape, lambda i: (0, 0)),        # resident W1
            pl.BlockSpec(b1.shape, lambda i: (0, 0)),        # resident b1
            pl.BlockSpec(w2.shape, lambda i: (0, 0)),        # resident W2
            pl.BlockSpec(b2.shape, lambda i: (0, 0)),        # resident b2
            pl.BlockSpec(w3.shape, lambda i: (0, 0)),        # resident W3
            pl.BlockSpec(b3.shape, lambda i: (0, 0)),        # resident b3
        ],
        # Last dim == full array dim (apd), so this narrow block is legal and
        # the output is written unpadded (no post-kernel slice needed).
        out_specs=pl.BlockSpec((tb, apd), lambda i: (i, 0)),
        compiler_params=pltpu.CompilerParams(
            dimension_semantics=("parallel",),        # megacore on v7x
            vmem_limit_bytes=32 * 1024 * 1024,        # plenty of headroom
        ),
        cost_estimate=pl.CostEstimate(
            flops=flops, transcendentals=0, bytes_accessed=bytes_accessed),
    )(state, w1, b1, w2, b2, w3, b3)

    return out


def init_param_actor(key, obs_dim, action_parameter_dim):
    """Deterministic init matching the PyTorch module's __init__.

    - hidden layers: kaiming_normal_ (relu) => N(0, sqrt(2/fan_in)), zero bias
    - output layer:  N(0, 1e-5), zero bias
    Weights are stored transposed (in, out) relative to torch's (out, in).
    """
    k1, k2, k3 = jax.random.split(key, 3)
    h1, h2 = 128, 64
    std1 = (2.0 / obs_dim) ** 0.5
    std2 = (2.0 / h1) ** 0.5
    w1 = jax.random.normal(k1, (obs_dim, h1), jnp.float32) * std1
    b1 = jnp.zeros((1, h1), jnp.float32)
    w2 = jax.random.normal(k2, (h1, h2), jnp.float32) * std2
    b2 = jnp.zeros((1, h2), jnp.float32)
    w3 = jax.random.normal(k3, (h2, action_parameter_dim), jnp.float32) * 1e-5
    b3 = jnp.zeros((1, action_parameter_dim), jnp.float32)
    return (w1, b1, w2, b2, w3, b3)


def param_actor_ref_f32(state, params):
    """Pure-JAX full-f32 reference (matches the PyTorch module's math)."""
    w1, b1, w2, b2, w3, b3 = params
    hi = jax.lax.Precision.HIGHEST
    x = jnp.maximum(jnp.dot(state, w1, precision=hi) + b1, 0.0)
    x = jnp.maximum(jnp.dot(x, w2, precision=hi) + b2, 0.0)
    return jnp.dot(x, w3, precision=hi) + b3


def param_actor_ref_bf16(state, params):
    """Reference with bf16 matmul operands / f32 accumulation."""
    w1, b1, w2, b2, w3, b3 = params
    bf = jnp.bfloat16
    h1 = jnp.maximum(
        jnp.dot(state.astype(bf), w1.astype(bf),
                preferred_element_type=jnp.float32) + b1, 0.0)
    h2 = jnp.maximum(
        jnp.dot(h1.astype(bf), w2.astype(bf),
                preferred_element_type=jnp.float32) + b2, 0.0)
    return jnp.dot(h2.astype(bf), w3.astype(bf),
                   preferred_element_type=jnp.float32) + b3


if __name__ == "__main__":
    key = jax.random.PRNGKey(0)
    k_param, k_state, k_w3, k_state2, k_state3 = jax.random.split(key, 5)

    batch = 8
    obs_dim = 16
    action_dim = 4            # unused by forward (kept for module signature parity)
    action_parameter_dim = 8

    # --- check 1: module-faithful init, small batch (single grid step) ---
    params = init_param_actor(k_param, obs_dim, action_parameter_dim)
    prepared = prepare_param_actor_params(params)
    state = jax.random.normal(k_state, (batch, obs_dim), jnp.float32)

    out = jax.block_until_ready(param_actor_forward(state, prepared))
    assert out.shape == (batch, action_parameter_dim)
    assert bool(jnp.all(jnp.isfinite(out)))
    ref_hi = param_actor_ref_f32(state, params)
    ref_bf = param_actor_ref_bf16(state, params)
    err_hi = float(jnp.max(jnp.abs(out - ref_hi)))
    err_bf = float(jnp.max(jnp.abs(out - ref_bf)))
    # Tight against whichever MXU precision scheme the backend used; always
    # within rounding distance of the true f32 answer.
    assert min(err_hi, err_bf) < 1e-4 and err_hi < 1e-2, \
        f"check 1 mismatch: err_hi={err_hi}, err_bf={err_bf}"

    # --- check 2: non-degenerate W3 (std 0.5, so the 3rd matmul is validated
    # non-vacuously), batch=200 with tile 64 => 4 grid steps including a
    # ragged (clipped) last block ---
    test_params = (params[0], params[1], params[2], params[3],
                   jax.random.normal(k_w3, (64, action_parameter_dim),
                                     jnp.float32) * 0.5,
                   params[5])
    prepared2 = prepare_param_actor_params(test_params)
    state2 = jax.random.normal(k_state2, (200, obs_dim), jnp.float32)

    out2 = jax.block_until_ready(
        param_actor_forward(state2, prepared2, tile_batch=64))
    assert out2.shape == (200, action_parameter_dim)
    assert bool(jnp.all(jnp.isfinite(out2)))
    ref2_hi = param_actor_ref_f32(state2, test_params)
    ref2_bf = param_actor_ref_bf16(state2, test_params)
    err2_hi = float(jnp.max(jnp.abs(out2 - ref2_hi)))
    err2_bf = float(jnp.max(jnp.abs(out2 - ref2_bf)))
    assert min(err2_hi, err2_bf) < 1e-3, \
        f"check 2 mismatch: err_hi={err2_hi}, err_bf={err2_bf}"
    assert err2_hi < 0.5, f"check 2 far from f32 reference: {err2_hi}"

    # --- check 3: larger batch exercises the >=2-step "parallel" grid path ---
    state3 = jax.random.normal(k_state3, (512, obs_dim), jnp.float32)
    out3 = jax.block_until_ready(param_actor_forward(state3, prepared2))
    assert out3.shape == (512, action_parameter_dim)
    assert bool(jnp.all(jnp.isfinite(out3)))

    print("KERNEL_OK")
</pallas_src>

<mosaic_0001>
module attributes {stable_mosaic.version = 11 : i64} {
  func.func @param_actor_kernel(%arg0: i32, %arg1: memref<8x16xf32, #tpu.memory_space<vmem>>, %arg2: memref<16x128xf32, #tpu.memory_space<vmem>>, %arg3: memref<1x128xf32, #tpu.memory_space<vmem>>, %arg4: memref<128x64xf32, #tpu.memory_space<vmem>>, %arg5: memref<1x64xf32, #tpu.memory_space<vmem>>, %arg6: memref<64x8xf32, #tpu.memory_space<vmem>>, %arg7: memref<1x8xf32, #tpu.memory_space<vmem>>, %arg8: memref<8x8xf32, #tpu.memory_space<vmem>>) attributes {dimension_semantics = [#tpu.dimension_semantics<parallel>], iteration_bounds = array<i64: 1>, scalar_prefetch = 0 : i64, scratch_operands = 0 : i64, tpu.core_type = #tpu.core_type<tc>, window_params = [{transform_indices = @transform_0, window_bounds = array<i64: 8, 16>}, {pipeline_mode = #tpu.pipeline_mode<synchronous>, transform_indices = @transform_1, window_bounds = array<i64: 16, 128>}, {pipeline_mode = #tpu.pipeline_mode<synchronous>, transform_indices = @transform_2, window_bounds = array<i64: 1, 128>}, {pipeline_mode = #tpu.pipeline_mode<synchronous>, transform_indices = @transform_3, window_bounds = array<i64: 128, 64>}, {pipeline_mode = #tpu.pipeline_mode<synchronous>, transform_indices = @transform_4, window_bounds = array<i64: 1, 64>}, {pipeline_mode = #tpu.pipeline_mode<synchronous>, transform_indices = @transform_5, window_bounds = array<i64: 64, 8>}, {pipeline_mode = #tpu.pipeline_mode<synchronous>, transform_indices = @transform_6, window_bounds = array<i64: 1, 8>}, {transform_indices = @transform_7, window_bounds = array<i64: 8, 8>}]} {
    %c0 = arith.constant 0 : index
    %c0_0 = arith.constant 0 : index
    %0 = vector.load %arg1[%c0, %c0_0] : memref<8x16xf32, #tpu.memory_space<vmem>>, vector<8x16xf32>
    %c0_1 = arith.constant 0 : index
    %c0_2 = arith.constant 0 : index
    %1 = vector.load %arg2[%c0_1, %c0_2] : memref<16x128xf32, #tpu.memory_space<vmem>>, vector<16x128xf32>
    %cst = arith.constant dense<0.000000e+00> : vector<8x128xf32>
    %2 = tpu.matmul %0, %1, %cst {dimension_numbers = #tpu.dot_dimension_numbers<[1], [0], [0], [1], [0, 0, 1, 1], [], []>} : vector<8x16xf32>, vector<16x128xf32>, vector<8x128xf32> -> vector<8x128xf32>
    %c0_3 = arith.constant 0 : index
    %c0_4 = arith.constant 0 : index
    %3 = vector.load %arg3[%c0_3, %c0_4] : memref<1x128xf32, #tpu.memory_space<vmem>>, vector<1x128xf32>
    %4 = vector.broadcast %3 : vector<1x128xf32> to vector<8x128xf32>
    %5 = arith.addf %2, %4 : vector<8x128xf32>
    %cst_5 = arith.constant 0.000000e+00 : f32
    %6 = vector.broadcast %cst_5 : f32 to vector<8x128xf32>
    %7 = arith.maximumf %5, %6 : vector<8x128xf32>
    %c0_6 = arith.constant 0 : index
    %c0_7 = arith.constant 0 : index
    %8 = vector.load %arg4[%c0_6, %c0_7] : memref<128x64xf32, #tpu.memory_space<vmem>>, vector<128x64xf32>
    %cst_8 = arith.constant dense<0.000000e+00> : vector<8x64xf32>
    %9 = tpu.matmul %7, %8, %cst_8 {dimension_numbers = #tpu.dot_dimension_numbers<[1], [0], [0], [1], [0, 0, 1, 1], [], []>} : vector<8x128xf32>, vector<128x64xf32>, vector<8x64xf32> -> vector<8x64xf32>
    %c0_9 = arith.constant 0 : index
    %c0_10 = arith.constant 0 : index
    %10 = vector.load %arg5[%c0_9, %c0_10] : memref<1x64xf32, #tpu.memory_space<vmem>>, vector<1x64xf32>
    %11 = vector.broadcast %10 : vector<1x64xf32> to vector<8x64xf32>
    %12 = arith.addf %9, %11 : vector<8x64xf32>
    %cst_11 = arith.constant 0.000000e+00 : f32
    %13 = vector.broadcast %cst_11 : f32 to vector<8x64xf32>
    %14 = arith.maximumf %12, %13 : vector<8x64xf32>
    %c0_12 = arith.constant 0 : index
    %c0_13 = arith.constant 0 : index
    %15 = vector.load %arg6[%c0_12, %c0_13] : memref<64x8xf32, #tpu.memory_space<vmem>>, vector<64x8xf32>
    %cst_14 = arith.constant dense<0.000000e+00> : vector<8x8xf32>
    %16 = tpu.matmul %14, %15, %cst_14 {dimension_numbers = #tpu.dot_dimension_numbers<[1], [0], [0], [1], [0, 0, 1, 1], [], []>} : vector<8x64xf32>, vector<64x8xf32>, vector<8x8xf32> -> vector<8x8xf32>
    %c0_15 = arith.constant 0 : index
    %c0_16 = arith.constant 0 : index
    %17 = vector.load %arg7[%c0_15, %c0_16] : memref<1x8xf32, #tpu.memory_space<vmem>>, vector<1x8xf32>
    %18 = vector.broadcast %17 : vector<1x8xf32> to vector<8x8xf32>
    %19 = arith.addf %16, %18 : vector<8x8xf32>
    %c0_17 = arith.constant 0 : index
    %c0_18 = arith.constant 0 : index
    %20 = vector.load %arg8[%c0_17, %c0_18] : memref<8x8xf32, #tpu.memory_space<vmem>>, vector<8x8xf32>
    tpu.vector_store %arg8[%c0_17, %c0_18], %19 {strides = array<i32>} : memref<8x8xf32, #tpu.memory_space<vmem>>, vector<8x8xf32>,
    return
  }
  func.func @transform_0(%arg0: i32) -> (i32, i32) {
    %c0_i32 = arith.constant 0 : i32
    %c0_i32_0 = arith.constant 0 : i32
    return %arg0, %c0_i32 : i32, i32
  }
  func.func @transform_1(%arg0: i32) -> (i32, i32) {
    %c0_i32 = arith.constant 0 : i32
    %c0_i32_0 = arith.constant 0 : i32
    %c0_i32_1 = arith.constant 0 : i32
    return %c0_i32, %c0_i32_0 : i32, i32
  }
  func.func @transform_2(%arg0: i32) -> (i32, i32) {
    %c0_i32 = arith.constant 0 : i32
    %c0_i32_0 = arith.constant 0 : i32
    %c0_i32_1 = arith.constant 0 : i32
    return %c0_i32, %c0_i32_0 : i32, i32
  }
  func.func @transform_3(%arg0: i32) -> (i32, i32) {
    %c0_i32 = arith.constant 0 : i32
    %c0_i32_0 = arith.constant 0 : i32
    %c0_i32_1 = arith.constant 0 : i32
    return %c0_i32, %c0_i32_0 : i32, i32
  }
  func.func @transform_4(%arg0: i32) -> (i32, i32) {
    %c0_i32 = arith.constant 0 : i32
    %c0_i32_0 = arith.constant 0 : i32
    %c0_i32_1 = arith.constant 0 : i32
    return %c0_i32, %c0_i32_0 : i32, i32
  }
  func.func @transform_5(%arg0: i32) -> (i32, i32) {
    %c0_i32 = arith.constant 0 : i32
    %c0_i32_0 = arith.constant 0 : i32
    %c0_i32_1 = arith.constant 0 : i32
    return %c0_i32, %c0_i32_0 : i32, i32
  }
  func.func @transform_6(%arg0: i32) -> (i32, i32) {
    %c0_i32 = arith.constant 0 : i32
    %c0_i32_0 = arith.constant 0 : i32
    %c0_i32_1 = arith.constant 0 : i32
    return %c0_i32, %c0_i32_0 : i32, i32
  }
  func.func @transform_7(%arg0: i32) -> (i32, i32) {
    %c0_i32 = arith.constant 0 : i32
    %c0_i32_0 = arith.constant 0 : i32
    return %arg0, %c0_i32 : i32, i32
  }
}

</mosaic_0001>

<llo_original>
// kernel: tpu_custom_call.1
$region0: #{tpu_custom_call.1}
  #allocation0 [shape = 'u32[]', space=smem, size = 0x4, offset = 0x4, fixed_abs, tag = 'smem constant byte address 0x4 - core index']
  #allocation1 [shape = 'u32[144,128]{1,0:T(1,128)}', space=vmem, size = 0x12000, scoped, tag = 'internal scratch']
  %s0 = inlined_call_operand.vmem [shape: f32[8,16], index: 0, kind: input, shape index: {}]
  %s1 = inlined_call_operand.vmem [shape: f32[16,128], index: 1, kind: input, shape index: {}]
  %s2 = inlined_call_operand.vmem [shape: f32[1,128], index: 2, kind: input, shape index: {}]
  %s3 = inlined_call_operand.vmem [shape: f32[128,64], index: 3, kind: input, shape index: {}]
  %s4 = inlined_call_operand.vmem [shape: f32[1,64], index: 4, kind: input, shape index: {}]
  %s5 = inlined_call_operand.vmem [shape: f32[64,8], index: 5, kind: input, shape index: {}]
  %s6 = inlined_call_operand.vmem [shape: f32[1,8], index: 6, kind: input, shape index: {}]
  %s7 = inlined_call_operand.hbm [shape: f32[8,8], index: 7, kind: output, shape index: {}]
  %s8 = sld [smem:[#allocation0]]
  $region38: #{tpu_custom_call.1} parent=0
    _
  %s10 = ssub.s32 1, %s8
  %s11 = scalar_select 0, %s10, %s8
  $region1: #{tpu_custom_call.1} parent=0
    #allocation2 [shape = 'u8[4096]{0}', space=vmem, size = 0x1000, scoped, tag = 'output window, operand 0, single buffered']
    #allocation3 [shape = 's32[1]{0}', space=sflag, size = 0x4, scoped, tag = 'scoped memory for tpu_custom_call.1']
    %12 = vsyncpa [#allocation3], 0
    // Predicated region
    $region2: #{tpu_custom_call.1} parent=1 // pred_check
      _
    $region3: #{tpu_custom_call.1} parent=1 // pred_check_branch
      %14 = sbr.rel (0) target = $region5
    $region4: #{tpu_custom_call.1} parent=1 // pred_region
      _
    $region5: #{tpu_custom_call.1} parent=1 // pred_fallthru
      _
    // Predicated region
    $region6: #{tpu_custom_call.1} parent=1 // pred_check
      _
    $region7: #{tpu_custom_call.1} parent=1 // pred_check_branch
      %16 = sbr.rel (0) target = $region9
    $region8: #{tpu_custom_call.1} parent=1 // pred_region
      _
    $region9: #{tpu_custom_call.1} parent=1 // pred_fallthru
      _
    // Predicated region
    $region10: #{tpu_custom_call.1} parent=1 // pred_check
      _
    $region11: #{tpu_custom_call.1} parent=1 // pred_check_branch
      %18 = sbr.rel (0) target = $region13
    $region12: #{tpu_custom_call.1} parent=1 // pred_region
      _
    $region13: #{tpu_custom_call.1} parent=1 // pred_fallthru
      _
    // Predicated region
    $region14: #{tpu_custom_call.1} parent=1 // pred_check
      _
    $region15: #{tpu_custom_call.1} parent=1 // pred_check_branch
      %20 = sbr.rel (0) target = $region17
    $region16: #{tpu_custom_call.1} parent=1 // pred_region
      _
    $region17: #{tpu_custom_call.1} parent=1 // pred_fallthru
      _
    // Predicated region
    $region18: #{tpu_custom_call.1} parent=1 // pred_check
      _
    $region19: #{tpu_custom_call.1} parent=1 // pred_check_branch
      %22 = sbr.rel (0) target = $region21
    $region20: #{tpu_custom_call.1} parent=1 // pred_region
      _
    $region21: #{tpu_custom_call.1} parent=1 // pred_fallthru
      _
    // Predicated region
    $region22: #{tpu_custom_call.1} parent=1 // pred_check
      _
    $region23: #{tpu_custom_call.1} parent=1 // pred_check_branch
      %24 = sbr.rel (0) target = $region25
    $region24: #{tpu_custom_call.1} parent=1 // pred_region
      _
    $region25: #{tpu_custom_call.1} parent=1 // pred_fallthru
      _
    // Predicated region
    $region26: #{tpu_custom_call.1} parent=1 // pred_check
      _
    $region27: #{tpu_custom_call.1} parent=1 // pred_check_branch
      %26 = sbr.rel (0) target = $region29
    $region28: #{tpu_custom_call.1} parent=1 // pred_region
      _
    $region29: #{tpu_custom_call.1} parent=1 // pred_fallthru
      _
    %v27 = vld [vmem:[%s0] sm:$0xff]
    %v28 = vld [vmem:[%s1] sm:$0xff]
    %v29 = vld [vmem:[%s1 + $0x8] sm:$0xff]
    %v30 = vld [vmem:[%s2] sm:$0x1]
    %v32 = vlaneseq
    %v33 = vshrl.u32 %v32, 7
    %v34 = vsub.s32 0, %v33
    %v35 = vrot.slane %v30, %v34
    %vm37 = vcmask 130048
    %v39 = vsel %vm37, %v27, 0
    %41 = vmatprep.subr.mxu0 0.0
    %42 = vmatpush1.msra.mxu0 0.0
    %43 = vmatprep.subr.mxu0 0.0
    %44 = vmatpush1.msra.mxu0 0.0
    %45 = vmatprep.subr.mxu0 0.0
    %46 = vmatpush1.msra.mxu0 0.0
    %47 = vmatprep.subr.mxu0 0.0
    %48 = vmatpush1.msra.mxu0 0.0
    %49 = vmatprep.subr.mxu0 0.0
    %50 = vmatpush1.msra.mxu0 0.0
    %51 = vmatprep.subr.mxu0 0.0
    %52 = vmatpush1.msra.mxu0 0.0
    %53 = vmatprep.subr.mxu0 0.0
    %54 = vmatpush1.msra.mxu0 0.0
    %55 = vmatprep.subr.mxu0 0.0
    %56 = vmatpush1.msra.mxu0 0.0
    %57 = vmatprep.subr.mxu0 0.0
    %58 = vmatpush1.msra.mxu0 0.0
    %59 = vmatprep.subr.mxu0 0.0
    %60 = vmatpush1.msra.mxu0 0.0
    %61 = vmatprep.subr.mxu0 0.0
    %62 = vmatpush1.msra.mxu0 0.0
    %63 = vmatprep.subr.mxu0 0.0
    %64 = vmatpush1.msra.mxu0 0.0
    %65 = vmatprep.subr.mxu0 0.0
    %66 = vmatpush1.msra.mxu0 0.0
    %67 = vmatprep.subr.mxu0 0.0
    %68 = vmatpush1.msra.mxu0 0.0
    %69 = vmatprep.subr.mxu0 0.0
    %70 = vmatpush1.msra.mxu0 %v29
    %71 = vmatprep.subr.mxu0 0.0
    %72 = vmatpush1.msra.mxu0 %v28
    %73 = vmatprep.subr.mxu0 0.0
    %74 = vmatpush2.msra.mxu0 0.0
    %75 = vmatprep.subr.mxu0 0.0
    %76 = vmatpush2.msra.mxu0 0.0
    %77 = vmatprep.subr.mxu0 0.0
    %78 = vmatpush2.msra.mxu0 0.0
    %79 = vmatprep.subr.mxu0 0.0
    %80 = vmatpush2.msra.mxu0 0.0
    %81 = vmatprep.subr.mxu0 0.0
    %82 = vmatpush2.msra.mxu0 0.0
    %83 = vmatprep.subr.mxu0 0.0
    %84 = vmatpush2.msra.mxu0 0.0
    %85 = vmatprep.subr.mxu0 0.0
    %86 = vmatpush2.msra.mxu0 0.0
    %87 = vmatprep.subr.mxu0 0.0
    %88 = vmatpush2.msra.mxu0 0.0
    %89 = vmatprep.subr.mxu0 0.0
    %90 = vmatpush2.msra.mxu0 0.0
    %91 = vmatprep.subr.mxu0 0.0
    %92 = vmatpush2.msra.mxu0 0.0
    %93 = vmatprep.subr.mxu0 0.0
    %94 = vmatpush2.msra.mxu0 0.0
    %95 = vmatprep.subr.mxu0 0.0
    %96 = vmatpush2.msra.mxu0 0.0
    %97 = vmatprep.subr.mxu0 0.0
    %98 = vmatpush2.msra.mxu0 0.0
    %99 = vmatprep.subr.mxu0 0.0
    %100 = vmatpush2.msra.mxu0 0.0
    %101 = vmatprep.subr.mxu0 0.0
    %102 = vmatpush2.msra.mxu0 0.0
    %103 = vmatprep.subr.mxu0 0.0
    %104 = vmatpush2.msra.mxu0 0.0
    %105 = vmatprep.mubr.f32.mxu0 0.0
    %106 = vmatmul.mubr.f32.gmra.mxu0 %v39
    %v107 = vpop.f32.mrf.mxu0
    %v108 = vadd.f32 %v35, %v107
    %v109 = vpop.f32.mrf.mxu0
    %110 = vdwg.mxu0
    %v111 = vmax.f32 %v108, 0.0
    %v112 = vld [vmem:[%s3] sm:$0xff]
    %v113 = vld [vmem:[%s3 + $0x8] sm:$0xff]
    %v114 = vld [vmem:[%s3 + $0x10] sm:$0xff]
    %v115 = vld [vmem:[%s3 + $0x18] sm:$0xff]
    %v116 = vld [vmem:[%s3 + $0x20] sm:$0xff]
    %v117 = vld [vmem:[%s3 + $0x28] sm:$0xff]
    %v118 = vld [vmem:[%s3 + $0x30] sm:$0xff]
    %v119 = vld [vmem:[%s3 + $0x38] sm:$0xff]
    %v120 = vld [vmem:[%s3 + $0x40] sm:$0xff]
    %v121 = vld [vmem:[%s3 + $0x48] sm:$0xff]
    %v122 = vld [vmem:[%s3 + $0x50] sm:$0xff]
    %v123 = vld [vmem:[%s3 + $0x58] sm:$0xff]
    %v124 = vld [vmem:[%s3 + $0x60] sm:$0xff]
    %v125 = vld [vmem:[%s3 + $0x68] sm:$0xff]
    %v126 = vld [vmem:[%s3 + $0x70] sm:$0xff]
    %v127 = vld [vmem:[%s3 + $0x78] sm:$0xff]
    %v128 = vld [vmem:[%s4] sm:$0x1]
    %v130 = vlaneseq
    %v131 = vshrl.u32 %v130, 7
    %v132 = vsub.s32 0, %v131
    %v133 = vrot.slane %v128, %v132
    %135 = vmatprep.subr.mxu0 0.0
    %136 = vmatpush1.msra.mxu0 %v127
    %137 = vmatprep.subr.mxu0 0.0
    %138 = vmatpush1.msra.mxu0 %v126
    %139 = vmatprep.subr.mxu0 0.0
    %140 = vmatpush1.msra.mxu0 %v125
    %141 = vmatprep.subr.mxu0 0.0
    %142 = vmatpush1.msra.mxu0 %v124
    %143 = vmatprep.subr.mxu0 0.0
    %144 = vmatpush1.msra.mxu0 %v123
    %145 = vmatprep.subr.mxu0 0.0
    %146 = vmatpush1.msra.mxu0 %v122
    %147 = vmatprep.subr.mxu0 0.0
    %148 = vmatpush1.msra.mxu0 %v121
    %149 = vmatprep.subr.mxu0 0.0
    %150 = vmatpush1.msra.mxu0 %v120
    %151 = vmatprep.subr.mxu0 0.0
    %152 = vmatpush1.msra.mxu0 %v119
    %153 = vmatprep.subr.mxu0 0.0
    %154 = vmatpush1.msra.mxu0 %v118
    %155 = vmatprep.subr.mxu0 0.0
    %156 = vmatpush1.msra.mxu0 %v117
    %157 = vmatprep.subr.mxu0 0.0
    %158 = vmatpush1.msra.mxu0 %v116
    %159 = vmatprep.subr.mxu0 0.0
    %160 = vmatpush1.msra.mxu0 %v115
    %161 = vmatprep.subr.mxu0 0.0
    %162 = vmatpush1.msra.mxu0 %v114
    %163 = vmatprep.subr.mxu0 0.0
    %164 = vmatpush1.msra.mxu0 %v113
    %165 = vmatprep.subr.mxu0 0.0
    %166 = vmatpush1.msra.mxu0 %v112
    %167 = vmatprep.subr.mxu0 0.0
    %168 = vmatpush2.msra.mxu0 0.0
    %169 = vmatprep.subr.mxu0 0.0
    %170 = vmatpush2.msra.mxu0 0.0
    %171 = vmatprep.subr.mxu0 0.0
    %172 = vmatpush2.msra.mxu0 0.0
    %173 = vmatprep.subr.mxu0 0.0
    %174 = vmatpush2.msra.mxu0 0.0
    %175 = vmatprep.subr.mxu0 0.0
    %176 = vmatpush2.msra.mxu0 0.0
    %177 = vmatprep.subr.mxu0 0.0
    %178 = vmatpush2.msra.mxu0 0.0
    %179 = vmatprep.subr.mxu0 0.0
    %180 = vmatpush2.msra.mxu0 0.0
    %181 = vmatprep.subr.mxu0 0.0
    %182 = vmatpush2.msra.mxu0 0.0
    %183 = vmatprep.subr.mxu0 0.0
    %184 = vmatpush2.msra.mxu0 0.0
    %185 = vmatprep.subr.mxu0 0.0
    %186 = vmatpush2.msra.mxu0 0.0
    %187 = vmatprep.subr.mxu0 0.0
    %188 = vmatpush2.msra.mxu0 0.0
    %189 = vmatprep.subr.mxu0 0.0
    %190 = vmatpush2.msra.mxu0 0.0
    %191 = vmatprep.subr.mxu0 0.0
    %192 = vmatpush2.msra.mxu0 0.0
    %193 = vmatprep.subr.mxu0 0.0
    %194 = vmatpush2.msra.mxu0 0.0
    %195 = vmatprep.subr.mxu0 0.0
    %196 = vmatpush2.msra.mxu0 0.0
    %197 = vmatprep.subr.mxu0 0.0
    %198 = vmatpush2.msra.mxu0 0.0
    %199 = vmatprep.mubr.f32.mxu0 0.0
    %200 = vmatmul.mubr.f32.gmra.mxu0 %v111
    %v201 = vpop.f32.mrf.mxu0
    %v202 = vadd.f32 %v133, %v201
    %v203 = vpop.f32.mrf.mxu0
    %204 = vdwg.mxu0
    %v205 = vmax.f32 %v202, 0.0
    %v206 = vld [vmem:[%s5] sm:$0xff]
    %v207 = vld [vmem:[%s5 + $0x8] sm:$0xff]
    %v208 = vld [vmem:[%s5 + $0x10] sm:$0xff]
    %v209 = vld [vmem:[%s5 + $0x18] sm:$0xff]
    %v210 = vld [vmem:[%s5 + $0x20] sm:$0xff]
    %v211 = vld [vmem:[%s5 + $0x28] sm:$0xff]
    %v212 = vld [vmem:[%s5 + $0x30] sm:$0xff]
    %v213 = vld [vmem:[%s5 + $0x38] sm:$0xff]
    %v214 = vld [vmem:[%s6] sm:$0x1]
    %v216 = vlaneseq
    %v217 = vshrl.u32 %v216, 7
    %v218 = vsub.s32 0, %v217
    %v219 = vrot.slane %v214, %v218
    %vm221 = vcmask 523264
    %v223 = vsel %vm221, %v205, 0
    %225 = vmatprep.subr.mxu0 0.0
    %226 = vmatpush1.msra.mxu0 0.0
    %227 = vmatprep.subr.mxu0 0.0
    %228 = vmatpush1.msra.mxu0 0.0
    %229 = vmatprep.subr.mxu0 0.0
    %230 = vmatpush1.msra.mxu0 0.0
    %231 = vmatprep.subr.mxu0 0.0
    %232 = vmatpush1.msra.mxu0 0.0
    %233 = vmatprep.subr.mxu0 0.0
    %234 = vmatpush1.msra.mxu0 0.0
    %235 = vmatprep.subr.mxu0 0.0
    %236 = vmatpush1.msra.mxu0 0.0
    %237 = vmatprep.subr.mxu0 0.0
    %238 = vmatpush1.msra.mxu0 0.0
    %239 = vmatprep.subr.mxu0 0.0
    %240 = vmatpush1.msra.mxu0 0.0
    %241 = vmatprep.subr.mxu0 0.0
    %242 = vmatpush1.msra.mxu0 %v213
    %243 = vmatprep.subr.mxu0 0.0
    %244 = vmatpush1.msra.mxu0 %v212
    %245 = vmatprep.subr.mxu0 0.0
    %246 = vmatpush1.msra.mxu0 %v211
    %247 = vmatprep.subr.mxu0 0.0
    %248 = vmatpush1.msra.mxu0 %v210
    %249 = vmatprep.subr.mxu0 0.0
    %250 = vmatpush1.msra.mxu0 %v209
    %251 = vmatprep.subr.mxu0 0.0
    %252 = vmatpush1.msra.mxu0 %v208
    %253 = vmatprep.subr.mxu0 0.0
    %254 = vmatpush1.msra.mxu0 %v207
    %255 = vmatprep.subr.mxu0 0.0
    %256 = vmatpush1.msra.mxu0 %v206
    %257 = vmatprep.subr.mxu0 0.0
    %258 = vmatpush2.msra.mxu0 0.0
    %259 = vmatprep.subr.mxu0 0.0
    %260 = vmatpush2.msra.mxu0 0.0
    %261 = vmatprep.subr.mxu0 0.0
    %262 = vmatpush2.msra.mxu0 0.0
    %263 = vmatprep.subr.mxu0 0.0
    %264 = vmatpush2.msra.mxu0 0.0
    %265 = vmatprep.subr.mxu0 0.0
    %266 = vmatpush2.msra.mxu0 0.0
    %267 = vmatprep.subr.mxu0 0.0
    %268 = vmatpush2.msra.mxu0 0.0
    %269 = vmatprep.subr.mxu0 0.0
    %270 = vmatpush2.msra.mxu0 0.0
    %271 = vmatprep.subr.mxu0 0.0
    %272 = vmatpush2.msra.mxu0 0.0
    %273 = vmatprep.subr.mxu0 0.0
    %274 = vmatpush2.msra.mxu0 0.0
    %275 = vmatprep.subr.mxu0 0.0
    %276 = vmatpush2.msra.mxu0 0.0
    %277 = vmatprep.subr.mxu0 0.0
    %278 = vmatpush2.msra.mxu0 0.0
    %279 = vmatprep.subr.mxu0 0.0
    %280 = vmatpush2.msra.mxu0 0.0
    %281 = vmatprep.subr.mxu0 0.0
    %282 = vmatpush2.msra.mxu0 0.0
    %283 = vmatprep.subr.mxu0 0.0
    %284 = vmatpush2.msra.mxu0 0.0
    %285 = vmatprep.subr.mxu0 0.0
    %286 = vmatpush2.msra.mxu0 0.0
    %287 = vmatprep.subr.mxu0 0.0
    %288 = vmatpush2.msra.mxu0 0.0
    %289 = vmatprep.mubr.f32.mxu0 0.0
    %290 = vmatmul.mubr.f32.gmra.mxu0 %v223
    %v291 = vpop.f32.mrf.mxu0
    %v292 = vadd.f32 %v219, %v291
    %v293 = vpop.f32.mrf.mxu0
    %294 = vdwg.mxu0
    %vm295 = vcmask 64512
    %296 = vst.msk [vmem:[#allocation2] sm:$0xff] %vm295, %v292
    // Predicated region
    $region30: #{tpu_custom_call.1} parent=1 // pred_check
      _
    $region31: #{tpu_custom_call.1} parent=1 // pred_check_branch
      %298 = sbr.rel (0) target = $region33
    $region32: #{tpu_custom_call.1} parent=1 // pred_region
      %s300 = ssub.s32 128, 128
      %301 = vsyncadd [#allocation3], %s300
      %s303 = sshll.u32 [#allocation2], 4
      %s304 = int_to_ptr.vmem [resolvable:$true] %s303
      %306 = dma.vmem_to_hbm [thread:$0]  %s304, 128, %s7, [#allocation3]
    $region33: #{tpu_custom_call.1} parent=1 // pred_fallthru
      _
    // Predicated region
    $region34: #{tpu_custom_call.1} parent=1 // pred_check
      _
    $region35: #{tpu_custom_call.1} parent=1 // pred_check_branch
      %308 = sbr.rel (0) target = $region37
    $region36: #{tpu_custom_call.1} parent=1 // pred_region
      %309 = dma.done [#allocation3], 128
    $region37: #{tpu_custom_call.1} parent=1 // pred_fallthru
      _
    %310 = vsyncpa [#allocation3], 1

</llo_original>
